<compile_context>
chip_gen: v7x
topology: tpu7x:2x2x1
jax: 0.10.0
libtpu: 0.0.40
codegen_flags: <defaults>
</compile_context>

<pallas_src>
import math
import functools

import jax
import jax.numpy as jnp
from jax.experimental import pallas as pl
from jax.experimental.pallas import tpu as pltpu


_LANE = 128
_TM_ALIGN = 16          # bf16 sublane packing: keep tm a multiple of 16
_BF16_BYTES = 2
_F32_BYTES = 4


def _round_up(x, m):
    return ((x + m - 1) // m) * m


def _vmem_budgets():
    """Return (tile_working_set_budget, vmem_limit_bytes), generation-aware."""
    cap = 64 * 1024 * 1024          # conservative default (v7x: 64 MiB per TC)
    try:
        info = pltpu.get_tpu_info()
        cap = int(getattr(info, "vmem_capacity_bytes", cap) or cap)
    except Exception:
        pass
    if cap >= 128 * 1024 * 1024:    # v5e / v6e: 128 MiB physical VMEM
        return 72 * 1024 * 1024, 96 * 1024 * 1024
    return 30 * 1024 * 1024, 48 * 1024 * 1024


def _plan_tiles(M, K, N, *, tm=None, tk=None, force_stream_weight=False):
    """Pick a tiling plan under the (generation-aware) VMEM budget."""
    Np = _round_up(N, _LANE)
    Kp = _round_up(K, _LANE)
    m_cap = _round_up(M, _TM_ALIGN)
    budget, vmem_limit = _vmem_budgets()

    # ---- tm candidates (multiples of 16, descending) ----
    if tm is not None:
        tm_cands = [min(m_cap, max(_TM_ALIGN, _round_up(tm, _TM_ALIGN)))]
    else:
        base = (1024, 768, 512, 384, 256, 192, 128, 96, 64, 48, 32, 16)
        tm_cands = sorted({c for c in base if c < m_cap} | {min(m_cap, 1024)},
                          reverse=True)
        # Megacore / 2-TC: keep at least 2 blocks along the "parallel" M axis
        # whenever M allows it (free ~2x on small-batch calls on v7x; one extra
        # ~0.35us grid step elsewhere).
        if m_cap >= 2 * _TM_ALIGN:
            half = _round_up(-(-m_cap // 2), _TM_ALIGN)
            tm_cands = [t for t in tm_cands if t <= half] or [_TM_ALIGN]

    # ---- tk candidates: divisors of Kp, multiples of 128, descending ----
    if tk is not None:
        tk_u = min(Kp, max(_LANE, _round_up(tk, _LANE)))
        while Kp % tk_u:
            tk_u -= _LANE
        tk_cands = [tk_u]
    else:
        tk_cands = sorted({d for d in (Kp, 8192, 4096, 2048, 1024, 512, 256, 128)
                           if d <= Kp and Kp % d == 0}, reverse=True)

    # Conservative (double-buffered) working-set estimate, bf16 operands,
    # f32 resident output block.
    chain_bytes = 2 * Np * Np * _BF16_BYTES + 4 * Np * _F32_BYTES

    def fits(tm_, tk_, resident):
        w0b = (2 * Kp * Np if resident else 2 * tk_ * Np) * _BF16_BYTES
        xb = 2 * tm_ * tk_ * _BF16_BYTES
        ob = 2 * tm_ * Np * _F32_BYTES
        return w0b + chain_bytes + xb + ob <= budget

    def make(tm_, tk_, resident):
        return dict(tm=tm_, tk=tk_, Mp=_round_up(M, tm_), Kp=Kp, Np=Np,
                    weight_resident=resident, vmem_limit=vmem_limit)

    # Stage 1: prefer the no-K-grid path (tk == Kp) with a reasonably large tm:
    # removes the per-K-step accumulator read-modify-write entirely.
    tm_floor = min(256, tm_cands[0])
    if (Kp in tk_cands) and not force_stream_weight:
        for tm_ in tm_cands:
            if tm_ < tm_floor:
                break
            if fits(tm_, Kp, True):
                return make(tm_, Kp, True)

    # Stage 2: maximize tm (minimizes M passes over the weight on the streamed
    # path), then tk; prefer weight-resident whenever it fits.
    for tm_ in tm_cands:
        for tk_ in tk_cands:
            resident = (not force_stream_weight) and fits(tm_, tk_, True)
            if resident or fits(tm_, tk_, False):
                return make(tm_, tk_, resident)

    raise ValueError(
        "ANN Pallas kernel: no tile configuration fits the VMEM budget "
        f"(M={M}, K={K}, N={N}, budget={budget} bytes). reduced_size is too "
        "large for a VMEM-resident fc weight on this chip.")


# -----------------------------------------------------------------------------
# Kernels
# -----------------------------------------------------------------------------
def _ann_single_k_kernel(x_ref, w0_ref, b0_ref, fcw_ref, fcb_ref, o_ref,
                         *, n_chain):
    """No K grid: one MXU pass over the whole (padded) K + fused epilogue."""
    y = jnp.dot(x_ref[...], w0_ref[...],
                preferred_element_type=jnp.float32) + b0_ref[...]
    if n_chain > 0:
        fcw = fcw_ref[...]
        fcb = fcb_ref[...]
        for _ in range(n_chain):
            # fc(dropout(relu(y))); dropout is identity in eval mode.
            # TODO(synk): training-mode dropout (Bernoulli mask via pltpu.prng_*)
            # not implemented; matches PyTorch .eval().
            y = jnp.dot(jnp.maximum(y, 0.0).astype(fcw.dtype), fcw,
                        preferred_element_type=jnp.float32) + fcb
    o_ref[...] = y


def _ann_multi_k_kernel(x_ref, w0_ref, b0_ref, fcw_ref, fcb_ref, o_ref,
                        *, tk, n_chain, weight_resident):
    """K-tiled fc0 with output-resident accumulation + fused epilogue."""
    k = pl.program_id(1)

    if weight_resident:
        # Whole fc0 weight lives in VMEM; slice the current K chunk.
        k_start = pl.multiple_of(k * tk, tk)
        w0 = w0_ref[pl.ds(k_start, tk), :]
    else:
        # Weight streamed along K by the BlockSpec.
        w0 = w0_ref[...]

    acc_part = jnp.dot(x_ref[...], w0, preferred_element_type=jnp.float32)

    @pl.when(k == 0)
    def _first():
        o_ref[...] = acc_part          # direct store: no zero-init pass

    @pl.when(k > 0)
    def _accum():
        o_ref[...] += acc_part

    @pl.when(k == pl.num_programs(1) - 1)
    def _finalize():
        y = o_ref[...] + b0_ref[...]
        if n_chain > 0:
            fcw = fcw_ref[...]
            fcb = fcb_ref[...]
            for _ in range(n_chain):
                # fc(dropout(relu(y))); dropout is identity in eval mode.
                y = jnp.dot(jnp.maximum(y, 0.0).astype(fcw.dtype), fcw,
                            preferred_element_type=jnp.float32) + fcb
        o_ref[...] = y


# -----------------------------------------------------------------------------
# ANN module (parameters + forward) in JAX, forward fused in Pallas
# -----------------------------------------------------------------------------
def init_ann_params(key, input_size, reduced_size):
    """Deterministic init mimicking nn.Linear default (uniform +-1/sqrt(fan_in))."""
    k0w, k0b, k1w, k1b = jax.random.split(key, 4)
    bound0 = 1.0 / math.sqrt(input_size)
    bound1 = 1.0 / math.sqrt(reduced_size)
    return {
        # stored as (in_features, out_features)
        "fc0_w": jax.random.uniform(k0w, (input_size, reduced_size),
                                    jnp.float32, -bound0, bound0),
        "fc0_b": jax.random.uniform(k0b, (reduced_size,),
                                    jnp.float32, -bound0, bound0),
        "fc_w": jax.random.uniform(k1w, (reduced_size, reduced_size),
                                   jnp.float32, -bound1, bound1),
        "fc_b": jax.random.uniform(k1b, (reduced_size,),
                                   jnp.float32, -bound1, bound1),
    }


def prepare_ann_params(params):
    """One-time pad (lane-dense N, 128-aligned K) + bf16 cast of the weights.

    Hoisted out of the forward so no per-call HBM copy of the weights remains.
    Biases stay f32 (added after the f32 accumulation).
    """
    K, N = params["fc0_w"].shape
    Kp, Np = _round_up(K, _LANE), _round_up(N, _LANE)
    w0 = jnp.pad(params["fc0_w"].astype(jnp.bfloat16),
                 ((0, Kp - K), (0, Np - N)))
    b0 = jnp.pad(params["fc0_b"].astype(jnp.float32), (0, Np - N)).reshape(1, Np)
    fcw = jnp.pad(params["fc_w"].astype(jnp.bfloat16),
                  ((0, Np - N), (0, Np - N)))
    fcb = jnp.pad(params["fc_b"].astype(jnp.float32), (0, Np - N)).reshape(1, Np)
    return {"w0": w0, "b0": b0, "fcw": fcw, "fcb": fcb,
            "K": K, "N": N, "Kp": Kp, "Np": Np}


def ann_forward(prepped, x, *, n_ANNlayers=1, tm=None, tk=None,
                _force_stream_weight=False):
    """x: (..., input_size) -> (..., reduced_size). Eval-mode forward."""
    lead = x.shape[:-1]
    K, N = prepped["K"], prepped["N"]
    Kp, Np = prepped["Kp"], prepped["Np"]
    assert x.shape[-1] == K, "last dim of x must equal input_size"
    x2d = x.reshape(-1, K)
    M = x2d.shape[0]

    plan = _plan_tiles(M, K, N, tm=tm, tk=tk,
                       force_stream_weight=_force_stream_weight)
    tm_, tk_, Mp = plan["tm"], plan["tk"], plan["Mp"]
    weight_resident = plan["weight_resident"]
    single_k = (tk_ == Kp)
    n_chain = max(0, n_ANNlayers - 1)

    # bf16 MXU operands (f32 accumulation inside the kernel). Skip the cast if
    # the caller already produces bf16.
    if x2d.dtype != jnp.bfloat16:
        x2d = x2d.astype(jnp.bfloat16)
    # Pad only when actually needed. Padding is exact: padded x columns / fc0_w
    # rows contribute 0, padded output columns stay 0 through the relu+fc chain
    # (padded fc_w rows/cols and biases are 0), padded rows are sliced off.
    if Mp != M or Kp != K:
        x2d = jnp.pad(x2d, ((0, Mp - M), (0, Kp - K)))

    w0, b0, fcw, fcb = prepped["w0"], prepped["b0"], prepped["fcw"], prepped["fcb"]

    flops = 2 * Mp * Kp * Np + n_chain * 2 * Mp * Np * Np
    bytes_accessed = ((Mp * Kp + Kp * Np + Np * Np) * _BF16_BYTES
                      + (Mp * Np + 2 * Np) * _F32_BYTES)
    cost = pl.CostEstimate(flops=flops, transcendentals=0,
                           bytes_accessed=bytes_accessed)

    if single_k:
        # Preferred path: one MXU pass per M tile, no accumulator RMW.
        kernel = functools.partial(_ann_single_k_kernel, n_chain=n_chain)
        grid_spec = pltpu.PrefetchScalarGridSpec(
            num_scalar_prefetch=0,
            grid=(Mp // tm_,),
            in_specs=[
                pl.BlockSpec((tm_, Kp), lambda i: (i, 0)),    # x slab (full K)
                pl.BlockSpec((Kp, Np), lambda i: (0, 0)),     # fc0 weight (resident)
                pl.BlockSpec((1, Np), lambda i: (0, 0)),      # fc0 bias (resident)
                pl.BlockSpec((Np, Np), lambda i: (0, 0)),     # fc weight (resident)
                pl.BlockSpec((1, Np), lambda i: (0, 0)),      # fc bias (resident)
            ],
            out_specs=pl.BlockSpec((tm_, Np), lambda i: (i, 0)),
        )
        dims = ("parallel",)
    else:
        kernel = functools.partial(_ann_multi_k_kernel, tk=tk_, n_chain=n_chain,
                                   weight_resident=weight_resident)
        if weight_resident:
            # Whole weight, constant index_map => DMA'd once, stays in VMEM.
            w0_spec = pl.BlockSpec((Kp, Np), lambda i, k: (0, 0))
        else:
            # Streamed K-tile of the weight.
            w0_spec = pl.BlockSpec((tk_, Np), lambda i, k: (k, 0))
        grid_spec = pltpu.PrefetchScalarGridSpec(
            num_scalar_prefetch=0,
            grid=(Mp // tm_, Kp // tk_),
            in_specs=[
                pl.BlockSpec((tm_, tk_), lambda i, k: (i, k)),  # x tile
                w0_spec,                                        # fc0 weight
                pl.BlockSpec((1, Np), lambda i, k: (0, 0)),     # fc0 bias
                pl.BlockSpec((Np, Np), lambda i, k: (0, 0)),    # fc weight
                pl.BlockSpec((1, Np), lambda i, k: (0, 0)),     # fc bias
            ],
            out_specs=pl.BlockSpec((tm_, Np), lambda i, k: (i, 0)),
        )
        dims = ("parallel", "arbitrary")

    out = pl.pallas_call(
        kernel,
        out_shape=jax.ShapeDtypeStruct((Mp, Np), jnp.float32),
        grid_spec=grid_spec,
        compiler_params=pltpu.CompilerParams(
            dimension_semantics=dims,
            vmem_limit_bytes=plan["vmem_limit"]),
        cost_estimate=cost,
    )(x2d, w0, b0, fcw, fcb)

    y = out[:M, :N]
    return y.reshape(*lead, N)


# -----------------------------------------------------------------------------
# Reference (pure JAX, f32) for a sanity check
# -----------------------------------------------------------------------------
def ann_forward_ref(params, x, *, n_ANNlayers=1):
    y = x @ params["fc0_w"] + params["fc0_b"]
    for _ in range(n_ANNlayers - 1):
        y = jnp.maximum(y, 0.0) @ params["fc_w"] + params["fc_b"]
    return y


if __name__ == "__main__":
    # Small shapes consistent with the module's forward: (batch, seq, input_size).
    # reduced_size=248 (the module default) exercises the N-padding (248 -> 256)
    # lane-dense output path; input_size scaled down from 8192 for the test.
    batch, seq = 2, 8
    input_size, reduced_size = 256, 248

    key = jax.random.PRNGKey(0)
    kparam, kx = jax.random.split(key)
    params = init_ann_params(kparam, input_size, reduced_size)
    prepped = prepare_ann_params(params)      # one-time pad + bf16 cast
    x = jax.random.normal(kx, (batch, seq, input_size), jnp.float32)

    # bf16 MXU operands vs f32 reference => relaxed tolerance.
    tol = dict(atol=3e-2, rtol=3e-2)

    # n_ANNlayers=1 (module default), auto plan: no-K-grid path, all weights
    # VMEM-resident, forward is just fc0.
    y1 = ann_forward(prepped, x, n_ANNlayers=1)
    jax.block_until_ready(y1)
    ref1 = ann_forward_ref(params, x, n_ANNlayers=1)
    assert y1.shape == (batch, seq, reduced_size)
    assert jnp.allclose(y1, ref1, **tol)

    # n_ANNlayers=3, forced multi-K grid: VMEM-resident fc0 weight sliced with
    # pl.ds, k==0 direct store, fused relu+fc chain in the epilogue.
    y3 = ann_forward(prepped, x, n_ANNlayers=3, tm=16, tk=128)
    jax.block_until_ready(y3)
    ref3 = ann_forward_ref(params, x, n_ANNlayers=3)
    assert jnp.allclose(y3, ref3, **tol)

    # Streamed-weight fallback path (used when fc0_w would not fit the VMEM
    # budget), exercised here explicitly with multiple K tiles.
    y2 = ann_forward(prepped, x, n_ANNlayers=2, tk=128, _force_stream_weight=True)
    jax.block_until_ready(y2)
    ref2 = ann_forward_ref(params, x, n_ANNlayers=2)
    assert jnp.allclose(y2, ref2, **tol)

    print("KERNEL_OK")
</pallas_src>

<mosaic_0001>
module attributes {stable_mosaic.version = 11 : i64} {
  func.func @_ann_single_k_kernel(%arg0: i32, %arg1: memref<16x256xbf16, #tpu.memory_space<vmem>>, %arg2: memref<256x256xbf16, #tpu.memory_space<vmem>>, %arg3: memref<1x256xf32, #tpu.memory_space<vmem>>, %arg4: memref<256x256xbf16, #tpu.memory_space<vmem>>, %arg5: memref<1x256xf32, #tpu.memory_space<vmem>>, %arg6: memref<16x256xf32, #tpu.memory_space<vmem>>) attributes {dimension_semantics = [#tpu.dimension_semantics<parallel>], iteration_bounds = array<i64: 1>, scalar_prefetch = 0 : i64, scratch_operands = 0 : i64, tpu.core_type = #tpu.core_type<tc>, window_params = [{transform_indices = @transform_0, window_bounds = array<i64: 16, 256>}, {pipeline_mode = #tpu.pipeline_mode<synchronous>, transform_indices = @transform_1, window_bounds = array<i64: 256, 256>}, {pipeline_mode = #tpu.pipeline_mode<synchronous>, transform_indices = @transform_2, window_bounds = array<i64: 1, 256>}, {pipeline_mode = #tpu.pipeline_mode<synchronous>, transform_indices = @transform_3, window_bounds = array<i64: 256, 256>}, {pipeline_mode = #tpu.pipeline_mode<synchronous>, transform_indices = @transform_4, window_bounds = array<i64: 1, 256>}, {transform_indices = @transform_5, window_bounds = array<i64: 16, 256>}]} {
    %c0 = arith.constant 0 : index
    %c0_0 = arith.constant 0 : index
    %0 = vector.load %arg1[%c0, %c0_0] : memref<16x256xbf16, #tpu.memory_space<vmem>>, vector<16x256xbf16>
    %c0_1 = arith.constant 0 : index
    %c0_2 = arith.constant 0 : index
    %1 = vector.load %arg2[%c0_1, %c0_2] : memref<256x256xbf16, #tpu.memory_space<vmem>>, vector<256x256xbf16>
    %cst = arith.constant dense<0.000000e+00> : vector<16x256xf32>
    %2 = tpu.matmul %0, %1, %cst {dimension_numbers = #tpu.dot_dimension_numbers<[1], [0], [0], [1], [0, 0, 1, 1], [], []>} : vector<16x256xbf16>, vector<256x256xbf16>, vector<16x256xf32> -> vector<16x256xf32>
    %c0_3 = arith.constant 0 : index
    %c0_4 = arith.constant 0 : index
    %3 = vector.load %arg3[%c0_3, %c0_4] : memref<1x256xf32, #tpu.memory_space<vmem>>, vector<1x256xf32>
    %4 = vector.broadcast %3 : vector<1x256xf32> to vector<16x256xf32>
    %5 = arith.addf %2, %4 : vector<16x256xf32>
    %c0_5 = arith.constant 0 : index
    %c0_6 = arith.constant 0 : index
    %6 = vector.load %arg6[%c0_5, %c0_6] : memref<16x256xf32, #tpu.memory_space<vmem>>, vector<16x256xf32>
    tpu.vector_store %arg6[%c0_5, %c0_6], %5 {strides = array<i32>} : memref<16x256xf32, #tpu.memory_space<vmem>>, vector<16x256xf32>,
    return
  }
  func.func @transform_0(%arg0: i32) -> (i32, i32) {
    %c0_i32 = arith.constant 0 : i32
    %c0_i32_0 = arith.constant 0 : i32
    return %arg0, %c0_i32 : i32, i32
  }
  func.func @transform_1(%arg0: i32) -> (i32, i32) {
    %c0_i32 = arith.constant 0 : i32
    %c0_i32_0 = arith.constant 0 : i32
    %c0_i32_1 = arith.constant 0 : i32
    return %c0_i32, %c0_i32_0 : i32, i32
  }
  func.func @transform_2(%arg0: i32) -> (i32, i32) {
    %c0_i32 = arith.constant 0 : i32
    %c0_i32_0 = arith.constant 0 : i32
    %c0_i32_1 = arith.constant 0 : i32
    return %c0_i32, %c0_i32_0 : i32, i32
  }
  func.func @transform_3(%arg0: i32) -> (i32, i32) {
    %c0_i32 = arith.constant 0 : i32
    %c0_i32_0 = arith.constant 0 : i32
    %c0_i32_1 = arith.constant 0 : i32
    return %c0_i32, %c0_i32_0 : i32, i32
  }
  func.func @transform_4(%arg0: i32) -> (i32, i32) {
    %c0_i32 = arith.constant 0 : i32
    %c0_i32_0 = arith.constant 0 : i32
    %c0_i32_1 = arith.constant 0 : i32
    return %c0_i32, %c0_i32_0 : i32, i32
  }
  func.func @transform_5(%arg0: i32) -> (i32, i32) {
    %c0_i32 = arith.constant 0 : i32
    %c0_i32_0 = arith.constant 0 : i32
    return %arg0, %c0_i32 : i32, i32
  }
}

</mosaic_0001>

<llo_original>
// kernel: tpu_custom_call.1
$region0: #{tpu_custom_call.1}
  #allocation0 [shape = 'u32[]', space=smem, size = 0x4, offset = 0x4, fixed_abs, tag = 'smem constant byte address 0x4 - core index']
  #allocation1 [shape = 'u32[144,128]{1,0:T(1,128)}', space=vmem, size = 0x12000, scoped, tag = 'internal scratch']
  %s0 = inlined_call_operand.hbm [shape: bf16[16,256], index: 0, kind: input, shape index: {}]
  %s1 = inlined_call_operand.hbm [shape: bf16[256,256], index: 1, kind: input, shape index: {}]
  %s2 = inlined_call_operand.vmem [shape: f32[1,256], index: 2, kind: input, shape index: {}]
  %s3 = inlined_call_operand.hbm [shape: bf16[256,256], index: 3, kind: input, shape index: {}]
  %s4 = inlined_call_operand.vmem [shape: f32[1,256], index: 4, kind: input, shape index: {}]
  %s5 = inlined_call_operand.hbm [shape: f32[16,256], index: 5, kind: output, shape index: {}]
  %s6 = sld [smem:[#allocation0]]
  $region42: #{tpu_custom_call.1} parent=0
    _
  %s8 = ssub.s32 1, %s6
  %s9 = scalar_select 0, %s8, %s6
  $region1: #{tpu_custom_call.1} parent=0
    #allocation2 [shape = 'u8[8192]{0}', space=vmem, size = 0x2000, scoped, tag = 'input window, operand 0, single buffered']
    #allocation3 [shape = 's32[1]{0}', space=sflag, size = 0x4, scoped, tag = 'scoped memory for tpu_custom_call.1']
    #allocation4 [shape = 's32[1]{0}', space=sflag, size = 0x4, scoped, tag = 'scoped memory for tpu_custom_call.1']
    #allocation5 [shape = 'u8[131072]{0}', space=vmem, size = 0x20000, scoped, tag = 'input window, operand 1, single buffered']
    #allocation6 [shape = 's32[1]{0}', space=sflag, size = 0x4, scoped, tag = 'scoped memory for tpu_custom_call.1']
    #allocation7 [shape = 'u8[131072]{0}', space=vmem, size = 0x20000, scoped, tag = 'input window, operand 3, single buffered']
    #allocation8 [shape = 'u8[16384]{0}', space=vmem, size = 0x4000, scoped, tag = 'output window, operand 0, single buffered']
    %10 = vsyncpa [#allocation3], 0
    %11 = vsyncpa [#allocation6], 0
    %12 = vsyncpa [#allocation4], 0
    // Predicated region
    $region2: #{tpu_custom_call.1} parent=1 // pred_check
      _
    $region3: #{tpu_custom_call.1} parent=1 // pred_check_branch
      %14 = sbr.rel (0) target = $region5
    $region4: #{tpu_custom_call.1} parent=1 // pred_region
      %s16 = ssub.s32 256, 256
      %17 = vsyncadd [#allocation3], %s16
      %s18 = sshll.u32 [#allocation2], 4
      %s19 = int_to_ptr.vmem [resolvable:$true] %s18
      %24 = dma.hbm_to_vmem [thread:$0]  %s0, 256, %s19, [#allocation3], 128, 128, 8
    $region5: #{tpu_custom_call.1} parent=1 // pred_fallthru
      _
    // Predicated region
    $region6: #{tpu_custom_call.1} parent=1 // pred_check
      _
    $region7: #{tpu_custom_call.1} parent=1 // pred_check_branch
      %26 = sbr.rel (0) target = $region9
    $region8: #{tpu_custom_call.1} parent=1 // pred_region
      %s28 = ssub.s32 4096, 4096
      %29 = vsyncadd [#allocation6], %s28
      %s30 = sshll.u32 [#allocation5], 4
      %s31 = int_to_ptr.vmem [resolvable:$true] %s30
      %36 = dma.hbm_to_vmem [thread:$0]  %s1, 4096, %s31, [#allocation6], 128, 128, 8
    $region9: #{tpu_custom_call.1} parent=1 // pred_fallthru
      _
    // Predicated region
    $region10: #{tpu_custom_call.1} parent=1 // pred_check
      _
    $region11: #{tpu_custom_call.1} parent=1 // pred_check_branch
      %38 = sbr.rel (0) target = $region13
    $region12: #{tpu_custom_call.1} parent=1 // pred_region
      _
    $region13: #{tpu_custom_call.1} parent=1 // pred_fallthru
      _
    // Predicated region
    $region14: #{tpu_custom_call.1} parent=1 // pred_check
      _
    $region15: #{tpu_custom_call.1} parent=1 // pred_check_branch
      %40 = sbr.rel (0) target = $region17
    $region16: #{tpu_custom_call.1} parent=1 // pred_region
      %s42 = ssub.s32 4096, 4096
      %43 = vsyncadd [#allocation6], %s42
      %s44 = sshll.u32 [#allocation7], 4
      %s45 = int_to_ptr.vmem [resolvable:$true] %s44
      %50 = dma.hbm_to_vmem [thread:$0]  %s3, 4096, %s45, [#allocation6], 128, 128, 8
    $region17: #{tpu_custom_call.1} parent=1 // pred_fallthru
      _
    // Predicated region
    $region18: #{tpu_custom_call.1} parent=1 // pred_check
      _
    $region19: #{tpu_custom_call.1} parent=1 // pred_check_branch
      %52 = sbr.rel (0) target = $region21
    $region20: #{tpu_custom_call.1} parent=1 // pred_region
      _
    $region21: #{tpu_custom_call.1} parent=1 // pred_fallthru
      _
    // Predicated region
    $region22: #{tpu_custom_call.1} parent=1 // pred_check
      _
    $region23: #{tpu_custom_call.1} parent=1 // pred_check_branch
      %54 = sbr.rel (0) target = $region25
    $region24: #{tpu_custom_call.1} parent=1 // pred_region
      %55 = dma.done [#allocation3], 256
    $region25: #{tpu_custom_call.1} parent=1 // pred_fallthru
      _
    // Predicated region
    $region26: #{tpu_custom_call.1} parent=1 // pred_check
      _
    $region27: #{tpu_custom_call.1} parent=1 // pred_check_branch
      %57 = sbr.rel (0) target = $region29
    $region28: #{tpu_custom_call.1} parent=1 // pred_region
      %58 = dma.done [#allocation6], 4096
    $region29: #{tpu_custom_call.1} parent=1 // pred_fallthru
      _
    // Predicated region
    $region30: #{tpu_custom_call.1} parent=1 // pred_check
      _
    $region31: #{tpu_custom_call.1} parent=1 // pred_check_branch
      %60 = sbr.rel (0) target = $region33
    $region32: #{tpu_custom_call.1} parent=1 // pred_region
      %61 = dma.done [#allocation6], 4096
    $region33: #{tpu_custom_call.1} parent=1 // pred_fallthru
      _
    %v62 = vld [vmem:[#allocation2] sm:$0xff]
    %v63 = vld [vmem:[#allocation2 + $0x8] sm:$0xff]
    %v64 = vld [vmem:[#allocation5] sm:$0xff]
    %v65 = vld [vmem:[#allocation5 + $0x8] sm:$0xff]
    %v66 = vld [vmem:[#allocation5 + $0x10] sm:$0xff]
    %v67 = vld [vmem:[#allocation5 + $0x18] sm:$0xff]
    %v68 = vld [vmem:[#allocation5 + $0x20] sm:$0xff]
    %v69 = vld [vmem:[#allocation5 + $0x28] sm:$0xff]
    %v70 = vld [vmem:[#allocation5 + $0x30] sm:$0xff]
    %v71 = vld [vmem:[#allocation5 + $0x38] sm:$0xff]
    %v72 = vld [vmem:[#allocation5 + $0x40] sm:$0xff]
    %v73 = vld [vmem:[#allocation5 + $0x48] sm:$0xff]
    %v74 = vld [vmem:[#allocation5 + $0x50] sm:$0xff]
    %v75 = vld [vmem:[#allocation5 + $0x58] sm:$0xff]
    %v76 = vld [vmem:[#allocation5 + $0x60] sm:$0xff]
    %v77 = vld [vmem:[#allocation5 + $0x68] sm:$0xff]
    %v78 = vld [vmem:[#allocation5 + $0x70] sm:$0xff]
    %v79 = vld [vmem:[#allocation5 + $0x78] sm:$0xff]
    %v80 = vld [vmem:[#allocation5 + $0x80] sm:$0xff]
    %v81 = vld [vmem:[#allocation5 + $0x88] sm:$0xff]
    %v82 = vld [vmem:[#allocation5 + $0x90] sm:$0xff]
    %v83 = vld [vmem:[#allocation5 + $0x98] sm:$0xff]
    %v84 = vld [vmem:[#allocation5 + $0xa0] sm:$0xff]
    %v85 = vld [vmem:[#allocation5 + $0xa8] sm:$0xff]
    %v86 = vld [vmem:[#allocation5 + $0xb0] sm:$0xff]
    %v87 = vld [vmem:[#allocation5 + $0xb8] sm:$0xff]
    %v88 = vld [vmem:[#allocation5 + $0xc0] sm:$0xff]
    %v89 = vld [vmem:[#allocation5 + $0xc8] sm:$0xff]
    %v90 = vld [vmem:[#allocation5 + $0xd0] sm:$0xff]
    %v91 = vld [vmem:[#allocation5 + $0xd8] sm:$0xff]
    %v92 = vld [vmem:[#allocation5 + $0xe0] sm:$0xff]
    %v93 = vld [vmem:[#allocation5 + $0xe8] sm:$0xff]
    %v94 = vld [vmem:[#allocation5 + $0xf0] sm:$0xff]
    %v95 = vld [vmem:[#allocation5 + $0xf8] sm:$0xff]
    %v96 = vld [vmem:[%s2] sm:$0x3]
    %v98 = vlaneseq
    %v99 = vshrl.u32 %v98, 7
    %v100 = vsub.s32 0, %v99
    %v101 = vrot.slane %v96, %v100
    %v102 = vlaneseq
    %v103 = vshrl.u32 %v102, 7
    %v104 = vsub.s32 1, %v103
    %v105 = vrot.slane %v96, %v104
    %v110 = vunpack.c.l.b16 %v62
    %v111 = vunpack.c.h.b16 %v62
    %v112 = vunpack.c.l.b16 %v63
    %v113 = vunpack.c.h.b16 %v63
    %v114 = vpack.c.b16 %v112, %v110
    %v115 = vpack.c.b16 %v113, %v111
    %v150 = vunpack.c.l.b16 %v64
    %v151 = vunpack.c.h.b16 %v64
    %v152 = vunpack.c.l.b16 %v65
    %v153 = vunpack.c.h.b16 %v65
    %v154 = vunpack.c.l.b16 %v66
    %v155 = vunpack.c.h.b16 %v66
    %v156 = vunpack.c.l.b16 %v67
    %v157 = vunpack.c.h.b16 %v67
    %v158 = vunpack.c.l.b16 %v68
    %v159 = vunpack.c.h.b16 %v68
    %v160 = vunpack.c.l.b16 %v69
    %v161 = vunpack.c.h.b16 %v69
    %v162 = vunpack.c.l.b16 %v70
    %v163 = vunpack.c.h.b16 %v70
    %v164 = vunpack.c.l.b16 %v71
    %v165 = vunpack.c.h.b16 %v71
    %v166 = vunpack.c.l.b16 %v72
    %v167 = vunpack.c.h.b16 %v72
    %v168 = vunpack.c.l.b16 %v73
    %v169 = vunpack.c.h.b16 %v73
    %v170 = vunpack.c.l.b16 %v74
    %v171 = vunpack.c.h.b16 %v74
    %v172 = vunpack.c.l.b16 %v75
    %v173 = vunpack.c.h.b16 %v75
    %v174 = vunpack.c.l.b16 %v76
    %v175 = vunpack.c.h.b16 %v76
    %v176 = vunpack.c.l.b16 %v77
    %v177 = vunpack.c.h.b16 %v77
    %v178 = vunpack.c.l.b16 %v78
    %v179 = vunpack.c.h.b16 %v78
    %v180 = vunpack.c.l.b16 %v79
    %v181 = vunpack.c.h.b16 %v79
    %v182 = vunpack.c.l.b16 %v80
    %v183 = vunpack.c.h.b16 %v80
    %v184 = vunpack.c.l.b16 %v81
    %v185 = vunpack.c.h.b16 %v81
    %v186 = vunpack.c.l.b16 %v82
    %v187 = vunpack.c.h.b16 %v82
    %v188 = vunpack.c.l.b16 %v83
    %v189 = vunpack.c.h.b16 %v83
    %v190 = vunpack.c.l.b16 %v84
    %v191 = vunpack.c.h.b16 %v84
    %v192 = vunpack.c.l.b16 %v85
    %v193 = vunpack.c.h.b16 %v85
    %v194 = vunpack.c.l.b16 %v86
    %v195 = vunpack.c.h.b16 %v86
    %v196 = vunpack.c.l.b16 %v87
    %v197 = vunpack.c.h.b16 %v87
    %v198 = vunpack.c.l.b16 %v88
    %v199 = vunpack.c.h.b16 %v88
    %v200 = vunpack.c.l.b16 %v89
    %v201 = vunpack.c.h.b16 %v89
    %v202 = vunpack.c.l.b16 %v90
    %v203 = vunpack.c.h.b16 %v90
    %v204 = vunpack.c.l.b16 %v91
    %v205 = vunpack.c.h.b16 %v91
    %v206 = vunpack.c.l.b16 %v92
    %v207 = vunpack.c.h.b16 %v92
    %v208 = vunpack.c.l.b16 %v93
    %v209 = vunpack.c.h.b16 %v93
    %v210 = vunpack.c.l.b16 %v94
    %v211 = vunpack.c.h.b16 %v94
    %v212 = vunpack.c.l.b16 %v95
    %v213 = vunpack.c.h.b16 %v95
    %v214 = vpack.c.b16 %v152, %v150
    %v215 = vpack.c.b16 %v153, %v151
    %v216 = vpack.c.b16 %v156, %v154
    %v217 = vpack.c.b16 %v157, %v155
    %v218 = vpack.c.b16 %v160, %v158
    %v219 = vpack.c.b16 %v161, %v159
    %v220 = vpack.c.b16 %v164, %v162
    %v221 = vpack.c.b16 %v165, %v163
    %v222 = vpack.c.b16 %v168, %v166
    %v223 = vpack.c.b16 %v169, %v167
    %v224 = vpack.c.b16 %v172, %v170
    %v225 = vpack.c.b16 %v173, %v171
    %v226 = vpack.c.b16 %v176, %v174
    %v227 = vpack.c.b16 %v177, %v175
    %v228 = vpack.c.b16 %v180, %v178
    %v229 = vpack.c.b16 %v181, %v179
    %v230 = vpack.c.b16 %v184, %v182
    %v231 = vpack.c.b16 %v185, %v183
    %v232 = vpack.c.b16 %v188, %v186
    %v233 = vpack.c.b16 %v189, %v187
    %v234 = vpack.c.b16 %v192, %v190
    %v235 = vpack.c.b16 %v193, %v191
    %v236 = vpack.c.b16 %v196, %v194
    %v237 = vpack.c.b16 %v197, %v195
    %v238 = vpack.c.b16 %v200, %v198
    %v239 = vpack.c.b16 %v201, %v199
    %v240 = vpack.c.b16 %v204, %v202
    %v241 = vpack.c.b16 %v205, %v203
    %v242 = vpack.c.b16 %v208, %v206
    %v243 = vpack.c.b16 %v209, %v207
    %v244 = vpack.c.b16 %v212, %v210
    %v245 = vpack.c.b16 %v213, %v211
    %278 = vmatprep.subr.bf16.mxu0 %v215
    %279 = vmatpush1.bf16.msra.mxu0 %v214
    %280 = vmatprep.subr.bf16.mxu0 %v217
    %281 = vmatpush1.bf16.msra.mxu0 %v216
    %282 = vmatprep.subr.bf16.mxu0 %v219
    %283 = vmatpush1.bf16.msra.mxu0 %v218
    %284 = vmatprep.subr.bf16.mxu0 %v221
    %285 = vmatpush1.bf16.msra.mxu0 %v220
    %286 = vmatprep.subr.bf16.mxu0 %v223
    %287 = vmatpush1.bf16.msra.mxu0 %v222
    %288 = vmatprep.subr.bf16.mxu0 %v225
    %289 = vmatpush1.bf16.msra.mxu0 %v224
    %290 = vmatprep.subr.bf16.mxu0 %v227
    %291 = vmatpush1.bf16.msra.mxu0 %v226
    %292 = vmatprep.subr.bf16.mxu0 %v229
    %293 = vmatpush1.bf16.msra.mxu0 %v228
    %294 = vmatprep.subr.bf16.mxu0 %v231
    %295 = vmatpush1.bf16.msra.mxu0 %v230
    %296 = vmatprep.subr.bf16.mxu0 %v233
    %297 = vmatpush1.bf16.msra.mxu0 %v232
    %298 = vmatprep.subr.bf16.mxu0 %v235
    %299 = vmatpush1.bf16.msra.mxu0 %v234
    %300 = vmatprep.subr.bf16.mxu0 %v237
    %301 = vmatpush1.bf16.msra.mxu0 %v236
    %302 = vmatprep.subr.bf16.mxu0 %v239
    %303 = vmatpush1.bf16.msra.mxu0 %v238
    %304 = vmatprep.subr.bf16.mxu0 %v241
    %305 = vmatpush1.bf16.msra.mxu0 %v240
    %306 = vmatprep.subr.bf16.mxu0 %v243
    %307 = vmatpush1.bf16.msra.mxu0 %v242
    %308 = vmatprep.subr.bf16.mxu0 %v245
    %309 = vmatpush1.bf16.msra.mxu0 %v244
    %310 = vmatprep.mubr.bf16.mxu0 %v115
    %311 = vmatmul.mubr.bf16.gmra.mrb[0].mxu0 %v114
    %v312 = vpop.f32.mrb[0].mxu0
    %v313 = vadd.f32 %v101, %v312
    %v314 = vpop.f32.mrb[0].mxu0
    %v315 = vadd.f32 %v105, %v314
    %v316 = vpop.f32.mrb[0].mxu0
    %v317 = vadd.f32 %v101, %v316
    %v318 = vpop.f32.mrb[0].mxu0
    %v319 = vadd.f32 %v105, %v318
    %320 = vdwg.mxu0
    %321 = vst [vmem:[#allocation8] sm:$0xff] %v313
    %322 = vst [vmem:[#allocation8 + $0x8] sm:$0xff] %v315
    %323 = vst [vmem:[#allocation8 + $0x10] sm:$0xff] %v317
    %324 = vst [vmem:[#allocation8 + $0x18] sm:$0xff] %v319
    // Predicated region
    $region34: #{tpu_custom_call.1} parent=1 // pred_check
      _
    $region35: #{tpu_custom_call.1} parent=1 // pred_check_branch
      %326 = sbr.rel (0) target = $region37
    $region36: #{tpu_custom_call.1} parent=1 // pred_region
      %s328 = ssub.s32 512, 512
      %329 = vsyncadd [#allocation4], %s328
      %s330 = sshll.u32 [#allocation8], 4
      %s331 = int_to_ptr.vmem [resolvable:$true] %s330
      %336 = dma.vmem_to_hbm [thread:$0]  %s331, 512, %s5, [#allocation4], 256, 256, 16
    $region37: #{tpu_custom_call.1} parent=1 // pred_fallthru
      _
    // Predicated region
    $region38: #{tpu_custom_call.1} parent=1 // pred_check
      _
    $region39: #{tpu_custom_call.1} parent=1 // pred_check_branch
      %338 = sbr.rel (0) target = $region41
    $region40: #{tpu_custom_call.1} parent=1 // pred_region
      %339 = dma.done [#allocation4], 512
    $region41: #{tpu_custom_call.1} parent=1 // pred_fallthru
      _
    %340 = vsyncpa [#allocation3], 1
    %341 = vsyncpa [#allocation6], 1
    %342 = vsyncpa [#allocation4], 1

</llo_original>
